<compile_context>
chip_gen: v6e
topology: v6e:2x2x1
jax: 0.10.0
libtpu: 0.0.40
codegen_flags: <defaults>
</compile_context>

<pallas_src>
import functools

import jax
import jax.numpy as jnp
from jax import lax
from jax.experimental import pallas as pl
from jax.experimental.pallas import tpu as pltpu

BN_EPS = 1e-5


def _stats_kernel(x_ref, gram_ref, sum_ref):
    # x_ref:    [1, Cin, T]    NCHW-native tile (spatial in lanes)
    # gram_ref: [1, Cin, Cin]  f32 per-batch partial Gram accumulator
    # sum_ref:  [1, Cin, 1]    f32 per-batch partial sum accumulator
    @pl.when(pl.program_id(1) == 0)
    def _():
        gram_ref[...] = jnp.zeros_like(gram_ref)
        sum_ref[...] = jnp.zeros_like(sum_ref)

    x = x_ref[0]                                                  # [Cin, T]
    # Gram matrix on the MXU: G += x @ x^T (contract the spatial/lane axis).
    g = lax.dot_general(x, x, dimension_numbers=(((1,), (1,)), ((), ())),
                        preferred_element_type=jnp.float32)       # [Cin, Cin]
    s = jnp.sum(x.astype(jnp.float32), axis=1, keepdims=True)     # [Cin, 1]
    gram_ref[0] = gram_ref[0] + g
    sum_ref[0] = sum_ref[0] + s


def _apply_kernel(x_ref, w_ref, scale_ref, shift_ref, o_ref):
    # x_ref:     [1, Cin, T]
    # w_ref:     [Cout, Cin]   1x1 conv weight, cast to x's dtype
    # scale_ref: [Cout, 1]     f32: gamma * rsqrt(var + eps)
    # shift_ref: [Cout, 1]     f32: beta - mean * scale  (conv bias cancels)
    # o_ref:     [1, Cout, T]  NCHW-native, lane-dense output tile
    x = x_ref[0]
    y = jnp.dot(w_ref[...], x, preferred_element_type=jnp.float32)   # [Cout, T]
    o_ref[0] = (y * scale_ref[...] + shift_ref[...]).astype(o_ref.dtype)


def _plan_spatial_tiling(S, Cin, Cout, itemsize):
    """Pick lane-dense spatial tile T (VMEM/channel aware) and padded length."""
    LANE = 128
    # Pass-2 pipelined buffers per spatial element: x in + out, double-buffered,
    # plus the f32 [Cout, T] matmul result.
    per_elem = 2 * (Cin + Cout) * itemsize + 4 * Cout
    budget = 24 * 1024 * 1024 - 2 * Cout * Cin * itemsize   # weight double buffer
    budget = max(budget, 4 * 1024 * 1024)
    t_max = max(LANE, min(4096, (budget // per_elem) // LANE * LANE))

    if S <= t_max:
        return S, S                      # single full-extent block
    best_t, best_pad = t_max, (-S) % t_max
    for t in range(t_max, LANE - 1, -LANE):
        pad = (-S) % t
        if pad * 32 <= S:                # <= ~3% padded work: take the largest such t
            return t, S + pad
        if pad < best_pad:
            best_t, best_pad = t, pad
    return best_t, S + best_pad


def _vmem_limit(T, Cin, Cout, itemsize):
    need = (2 * T * (Cin + Cout) * itemsize      # x/out double buffers
            + 2 * Cout * Cin * itemsize          # weight (double-buffered)
            + T * Cout * 4                       # f32 matmul result
            + (2 << 20))                         # scale/shift/accumulators/slack
    return int(min(max(need, 32 << 20), 48 << 20))


@functools.partial(jax.jit, static_argnames=("stride",))
def skipconn2d_pallas(x_nchw, w, b, gamma, beta, stride=1):
    """x_nchw: [N, Cin, H, W]; w: [Cout, Cin]; returns [N, Cout, Ho, Wo]."""
    del b  # conv bias is exactly cancelled by training-mode BatchNorm
    N, Cin, H, W = x_nchw.shape
    Cout = w.shape[0]

    if stride != 1:
        # TODO(synk): fold the stride subsample into the kernel access pattern
        # (strided DMA / index_map) instead of materializing the slice in HBM.
        x_s = x_nchw[:, :, ::stride, ::stride]
    else:
        x_s = x_nchw
    Ho, Wo = x_s.shape[2], x_s.shape[3]
    S = Ho * Wo
    x3 = x_s.reshape(N, Cin, S)          # NCHW-native: reshape only, no transpose

    itemsize = jnp.dtype(x_nchw.dtype).itemsize
    T, S_pad = _plan_spatial_tiling(S, Cin, Cout, itemsize)
    if S_pad != S:
        # Zero padding is exact for sum / Gram (divide by the true N*S below).
        x3 = jnp.pad(x3, ((0, 0), (0, 0), (0, S_pad - S)))
    n_t = S_pad // T
    grid = (N, n_t)
    vmem_limit = _vmem_limit(T, Cin, Cout, itemsize)

    # Keep the MXU in the input dtype (bf16-native on v5e for bf16 inputs).
    w_x = w.astype(x_nchw.dtype)

    # ---- pass 1: per-batch partial Gram + sum of x (x-only statistics) ------
    gram_p, sum_p = pl.pallas_call(
        _stats_kernel,
        out_shape=(jax.ShapeDtypeStruct((N, Cin, Cin), jnp.float32),
                   jax.ShapeDtypeStruct((N, Cin, 1), jnp.float32)),
        grid=grid,
        in_specs=[pl.BlockSpec((1, Cin, T), lambda n, t: (n, 0, t))],
        out_specs=(pl.BlockSpec((1, Cin, Cin), lambda n, t: (n, 0, 0)),
                   pl.BlockSpec((1, Cin, 1), lambda n, t: (n, 0, 0))),
        compiler_params=pltpu.CompilerParams(
            dimension_semantics=("parallel", "arbitrary"),
            vmem_limit_bytes=vmem_limit),
    )(x3)

    # ---- tiny per-channel finalize in plain JAX (folds W into the stats) ----
    cnt = jnp.float32(N * S)                       # true count (padding excluded)
    gram = jnp.sum(gram_p, axis=0)                 # [Cin, Cin]
    sum_x = jnp.sum(sum_p, axis=0)[:, 0]           # [Cin]
    w32 = w.astype(jnp.float32)
    sum_y = w32 @ sum_x                            # [Cout]
    sq_y = jnp.sum((w32 @ gram) * w32, axis=1)     # [Cout] = w_c G w_c^T
    mean = sum_y / cnt
    var = jnp.maximum(sq_y / cnt - mean * mean, 0.0)
    scale = gamma.astype(jnp.float32) * lax.rsqrt(var + BN_EPS)
    shift = beta.astype(jnp.float32) - mean * scale
    scale2 = scale.reshape(Cout, 1)
    shift2 = shift.reshape(Cout, 1)

    # ---- pass 2: out = scale * (W @ x) + shift, lane-dense NCHW tiles -------
    out3 = pl.pallas_call(
        _apply_kernel,
        out_shape=jax.ShapeDtypeStruct((N, Cout, S_pad), x_nchw.dtype),
        grid=grid,
        in_specs=[
            pl.BlockSpec((1, Cin, T), lambda n, t: (n, 0, t)),
            pl.BlockSpec((Cout, Cin), lambda n, t: (0, 0)),
            pl.BlockSpec((Cout, 1), lambda n, t: (0, 0)),
            pl.BlockSpec((Cout, 1), lambda n, t: (0, 0)),
        ],
        out_specs=pl.BlockSpec((1, Cout, T), lambda n, t: (n, 0, t)),
        compiler_params=pltpu.CompilerParams(
            dimension_semantics=("parallel", "parallel"),
            vmem_limit_bytes=vmem_limit),
    )(x3, w_x, scale2, shift2)

    if S_pad != S:
        out3 = out3[:, :, :S]
    return out3.reshape(N, Cout, Ho, Wo)


def skipconn2d_ref(x_nchw, w, b, gamma, beta, stride=1):
    """Pure-JAX reference matching torch Conv2d(k=1) + BatchNorm2d (training)."""
    x_s = x_nchw[:, :, ::stride, ::stride].astype(jnp.float32)
    y = jnp.einsum("nihw,oi->nohw", x_s, w.astype(jnp.float32))
    y = y + b.reshape(1, -1, 1, 1)
    mean = jnp.mean(y, axis=(0, 2, 3), keepdims=True)
    var = jnp.mean((y - mean) ** 2, axis=(0, 2, 3), keepdims=True)
    y_hat = (y - mean) / jnp.sqrt(var + BN_EPS)
    return (y_hat * gamma.reshape(1, -1, 1, 1)
            + beta.reshape(1, -1, 1, 1)).astype(x_nchw.dtype)


if __name__ == "__main__":
    # Small shapes consistent with the module.
    N, Cin, Cout, HW, stride = 2, 4, 8, 16, 2

    key = jax.random.PRNGKey(0)
    kx, kw, kb, kg, kbt = jax.random.split(key, 5)

    x = jax.random.normal(kx, (N, Cin, HW, HW), dtype=jnp.float32)

    # nn.Conv2d(k=1) init bound; weight stored as [Cout, Cin] (torch layout, squeezed).
    fan_in = Cin
    bound = 1.0 / (fan_in ** 0.5)
    w = jax.random.uniform(kw, (Cout, Cin), jnp.float32, -bound, bound)
    b = jax.random.uniform(kb, (Cout,), jnp.float32, -bound, bound)
    # BN default init is ones/zeros; perturb slightly to exercise the affine path.
    gamma = 1.0 + 0.1 * jax.random.uniform(kg, (Cout,), jnp.float32, -1.0, 1.0)
    beta = 0.1 * jax.random.uniform(kbt, (Cout,), jnp.float32, -1.0, 1.0)

    out = skipconn2d_pallas(x, w, b, gamma, beta, stride=stride)
    out = jax.block_until_ready(out)

    ref = skipconn2d_ref(x, w, b, gamma, beta, stride=stride)
    assert out.shape == (N, Cout, HW // stride, HW // stride), out.shape
    max_err = float(jnp.max(jnp.abs(out.astype(jnp.float32) - ref.astype(jnp.float32))))
    assert max_err < 1e-4, max_err

    print("KERNEL_OK")
</pallas_src>

<mosaic_0001>
module attributes {stable_mosaic.version = 11 : i64} {
  func.func @_stats_kernel(%arg0: i32, %arg1: i32, %arg2: memref<1x4x64xf32, #tpu.memory_space<vmem>>, %arg3: memref<1x4x4xf32, #tpu.memory_space<vmem>>, %arg4: memref<1x4x1xf32, #tpu.memory_space<vmem>>) attributes {dimension_semantics = [#tpu.dimension_semantics<parallel>, #tpu.dimension_semantics<arbitrary>], iteration_bounds = array<i64: 2, 1>, scalar_prefetch = 0 : i64, scratch_operands = 0 : i64, tpu.core_type = #tpu.core_type<tc>, window_params = [{transform_indices = @transform_0, window_bounds = array<i64: 1, 4, 64>}, {transform_indices = @transform_1, window_bounds = array<i64: 1, 4, 4>}, {transform_indices = @transform_2, window_bounds = array<i64: 1, 4, 1>}]} {
    %c0_i32 = arith.constant 0 : i32
    %0 = arith.cmpi eq, %arg1, %c0_i32 : i32
    %1 = arith.extui %0 : i1 to i32
    %c0_i32_0 = arith.constant 0 : i32
    %2 = arith.cmpi ne, %1, %c0_i32_0 : i32
    scf.if %2 {
      %cst_16 = arith.constant 0.000000e+00 : f32
      %20 = vector.broadcast %cst_16 : f32 to vector<1x4x4xf32>
      %c0_17 = arith.constant 0 : index
      %c0_18 = arith.constant 0 : index
      %c0_19 = arith.constant 0 : index
      %21 = vector.load %arg3[%c0_17, %c0_18, %c0_19] : memref<1x4x4xf32, #tpu.memory_space<vmem>>, vector<1x4x4xf32>
      tpu.vector_store %arg3[%c0_17, %c0_18, %c0_19], %20 {strides = array<i32>} : memref<1x4x4xf32, #tpu.memory_space<vmem>>, vector<1x4x4xf32>,
      %cst_20 = arith.constant 0.000000e+00 : f32
      %22 = vector.broadcast %cst_20 : f32 to vector<1x4x1xf32>
      %c0_21 = arith.constant 0 : index
      %c0_22 = arith.constant 0 : index
      %c0_23 = arith.constant 0 : index
      %23 = vector.load %arg4[%c0_21, %c0_22, %c0_23] : memref<1x4x1xf32, #tpu.memory_space<vmem>>, vector<1x4x1xf32>
      tpu.vector_store %arg4[%c0_21, %c0_22, %c0_23], %22 {strides = array<i32>} : memref<1x4x1xf32, #tpu.memory_space<vmem>>, vector<1x4x1xf32>,
    } else {
    }
    %c0 = arith.constant 0 : index
    %c0_1 = arith.constant 0 : index
    %c0_2 = arith.constant 0 : index
    %3 = vector.load %arg2[%c0, %c0_1, %c0_2] : memref<1x4x64xf32, #tpu.memory_space<vmem>>, vector<1x4x64xf32>
    %4 = vector.shape_cast %3 : vector<1x4x64xf32> to vector<4x64xf32>
    %cst = arith.constant dense<0.000000e+00> : vector<4x4xf32>
    %5 = tpu.matmul %4, %4, %cst {dimension_numbers = #tpu.dot_dimension_numbers<[1], [1], [0], [0], [0, 0, 1, 0], [], []>} : vector<4x64xf32>, vector<4x64xf32>, vector<4x4xf32> -> vector<4x4xf32>
    %cst_3 = arith.constant dense<0.000000e+00> : vector<4xf32>
    %6 = vector.multi_reduction <add>, %4, %cst_3 [1] : vector<4x64xf32> to vector<4xf32>
    %7 = vector.shape_cast %6 : vector<4xf32> to vector<4x1xf32>
    %c0_4 = arith.constant 0 : index
    %c0_5 = arith.constant 0 : index
    %c0_6 = arith.constant 0 : index
    %8 = vector.load %arg3[%c0_4, %c0_5, %c0_6] : memref<1x4x4xf32, #tpu.memory_space<vmem>>, vector<1x4x4xf32>
    %9 = vector.shape_cast %8 : vector<1x4x4xf32> to vector<4x4xf32>
    %10 = arith.addf %9, %5 : vector<4x4xf32>
    %c0_7 = arith.constant 0 : index
    %c0_8 = arith.constant 0 : index
    %c0_9 = arith.constant 0 : index
    %11 = vector.load %arg3[%c0_7, %c0_8, %c0_9] : memref<1x4x4xf32, #tpu.memory_space<vmem>>, vector<1x4x4xf32>
    %12 = vector.shape_cast %11 : vector<1x4x4xf32> to vector<4x4xf32>
    %13 = vector.shape_cast %10 : vector<4x4xf32> to vector<1x4x4xf32>
    tpu.vector_store %arg3[%c0_7, %c0_8, %c0_9], %13 {strides = array<i32>} : memref<1x4x4xf32, #tpu.memory_space<vmem>>, vector<1x4x4xf32>,
    %c0_10 = arith.constant 0 : index
    %c0_11 = arith.constant 0 : index
    %c0_12 = arith.constant 0 : index
    %14 = vector.load %arg4[%c0_10, %c0_11, %c0_12] : memref<1x4x1xf32, #tpu.memory_space<vmem>>, vector<1x4x1xf32>
    %15 = vector.shape_cast %14 : vector<1x4x1xf32> to vector<4x1xf32>
    %16 = arith.addf %15, %7 : vector<4x1xf32>
    %c0_13 = arith.constant 0 : index
    %c0_14 = arith.constant 0 : index
    %c0_15 = arith.constant 0 : index
    %17 = vector.load %arg4[%c0_13, %c0_14, %c0_15] : memref<1x4x1xf32, #tpu.memory_space<vmem>>, vector<1x4x1xf32>
    %18 = vector.shape_cast %17 : vector<1x4x1xf32> to vector<4x1xf32>
    %19 = vector.shape_cast %16 : vector<4x1xf32> to vector<1x4x1xf32>
    tpu.vector_store %arg4[%c0_13, %c0_14, %c0_15], %19 {strides = array<i32>} : memref<1x4x1xf32, #tpu.memory_space<vmem>>, vector<1x4x1xf32>,
    return
  }
  func.func @transform_0(%arg0: i32, %arg1: i32) -> (i32, i32, i32) {
    %c0_i32 = arith.constant 0 : i32
    %c0_i32_0 = arith.constant 0 : i32
    return %arg0, %c0_i32, %arg1 : i32, i32, i32
  }
  func.func @transform_1(%arg0: i32, %arg1: i32) -> (i32, i32, i32) {
    %c0_i32 = arith.constant 0 : i32
    %c0_i32_0 = arith.constant 0 : i32
    %c0_i32_1 = arith.constant 0 : i32
    return %arg0, %c0_i32, %c0_i32_0 : i32, i32, i32
  }
  func.func @transform_2(%arg0: i32, %arg1: i32) -> (i32, i32, i32) {
    %c0_i32 = arith.constant 0 : i32
    %c0_i32_0 = arith.constant 0 : i32
    %c0_i32_1 = arith.constant 0 : i32
    return %arg0, %c0_i32, %c0_i32_0 : i32, i32, i32
  }
}

module attributes {stable_mosaic.version = 11 : i64} {
  func.func @_apply_kernel(%arg0: i32, %arg1: i32, %arg2: memref<1x4x64xf32, #tpu.memory_space<vmem>>, %arg3: memref<8x4xf32, #tpu.memory_space<vmem>>, %arg4: memref<8x1xf32, #tpu.memory_space<vmem>>, %arg5: memref<8x1xf32, #tpu.memory_space<vmem>>, %arg6: memref<1x8x64xf32, #tpu.memory_space<vmem>>) attributes {dimension_semantics = [#tpu.dimension_semantics<parallel>, #tpu.dimension_semantics<parallel>], iteration_bounds = array<i64: 2, 1>, scalar_prefetch = 0 : i64, scratch_operands = 0 : i64, tpu.core_type = #tpu.core_type<tc>, window_params = [{transform_indices = @transform_0, window_bounds = array<i64: 1, 4, 64>}, {pipeline_mode = #tpu.pipeline_mode<synchronous>, transform_indices = @transform_1, window_bounds = array<i64: 8, 4>}, {pipeline_mode = #tpu.pipeline_mode<synchronous>, transform_indices = @transform_2, window_bounds = array<i64: 8, 1>}, {pipeline_mode = #tpu.pipeline_mode<synchronous>, transform_indices = @transform_3, window_bounds = array<i64: 8, 1>}, {transform_indices = @transform_4, window_bounds = array<i64: 1, 8, 64>}]} {
    %c0 = arith.constant 0 : index
    %c0_0 = arith.constant 0 : index
    %c0_1 = arith.constant 0 : index
    %0 = vector.load %arg2[%c0, %c0_0, %c0_1] : memref<1x4x64xf32, #tpu.memory_space<vmem>>, vector<1x4x64xf32>
    %1 = vector.shape_cast %0 : vector<1x4x64xf32> to vector<4x64xf32>
    %c0_2 = arith.constant 0 : index
    %c0_3 = arith.constant 0 : index
    %2 = vector.load %arg3[%c0_2, %c0_3] : memref<8x4xf32, #tpu.memory_space<vmem>>, vector<8x4xf32>
    %cst = arith.constant dense<0.000000e+00> : vector<8x64xf32>
    %3 = tpu.matmul %2, %1, %cst {dimension_numbers = #tpu.dot_dimension_numbers<[1], [0], [0], [1], [0, 0, 1, 1], [], []>} : vector<8x4xf32>, vector<4x64xf32>, vector<8x64xf32> -> vector<8x64xf32>
    %c0_4 = arith.constant 0 : index
    %c0_5 = arith.constant 0 : index
    %4 = vector.load %arg4[%c0_4, %c0_5] : memref<8x1xf32, #tpu.memory_space<vmem>>, vector<8x1xf32>
    %5 = vector.broadcast %4 : vector<8x1xf32> to vector<8x64xf32>
    %6 = arith.mulf %3, %5 : vector<8x64xf32>
    %c0_6 = arith.constant 0 : index
    %c0_7 = arith.constant 0 : index
    %7 = vector.load %arg5[%c0_6, %c0_7] : memref<8x1xf32, #tpu.memory_space<vmem>>, vector<8x1xf32>
    %8 = vector.broadcast %7 : vector<8x1xf32> to vector<8x64xf32>
    %9 = arith.addf %6, %8 : vector<8x64xf32>
    %c0_8 = arith.constant 0 : index
    %c0_9 = arith.constant 0 : index
    %c0_10 = arith.constant 0 : index
    %10 = vector.load %arg6[%c0_8, %c0_9, %c0_10] : memref<1x8x64xf32, #tpu.memory_space<vmem>>, vector<1x8x64xf32>
    %11 = vector.shape_cast %10 : vector<1x8x64xf32> to vector<8x64xf32>
    %12 = vector.shape_cast %9 : vector<8x64xf32> to vector<1x8x64xf32>
    tpu.vector_store %arg6[%c0_8, %c0_9, %c0_10], %12 {strides = array<i32>} : memref<1x8x64xf32, #tpu.memory_space<vmem>>, vector<1x8x64xf32>,
    return
  }
  func.func @transform_0(%arg0: i32, %arg1: i32) -> (i32, i32, i32) {
    %c0_i32 = arith.constant 0 : i32
    %c0_i32_0 = arith.constant 0 : i32
    return %arg0, %c0_i32, %arg1 : i32, i32, i32
  }
  func.func @transform_1(%arg0: i32, %arg1: i32) -> (i32, i32) {
    %c0_i32 = arith.constant 0 : i32
    %c0_i32_0 = arith.constant 0 : i32
    %c0_i32_1 = arith.constant 0 : i32
    return %c0_i32, %c0_i32_0 : i32, i32
  }
  func.func @transform_2(%arg0: i32, %arg1: i32) -> (i32, i32) {
    %c0_i32 = arith.constant 0 : i32
    %c0_i32_0 = arith.constant 0 : i32
    %c0_i32_1 = arith.constant 0 : i32
    return %c0_i32, %c0_i32_0 : i32, i32
  }
  func.func @transform_3(%arg0: i32, %arg1: i32) -> (i32, i32) {
    %c0_i32 = arith.constant 0 : i32
    %c0_i32_0 = arith.constant 0 : i32
    %c0_i32_1 = arith.constant 0 : i32
    return %c0_i32, %c0_i32_0 : i32, i32
  }
  func.func @transform_4(%arg0: i32, %arg1: i32) -> (i32, i32, i32) {
    %c0_i32 = arith.constant 0 : i32
    %c0_i32_0 = arith.constant 0 : i32
    return %arg0, %c0_i32, %arg1 : i32, i32, i32
  }
}

</mosaic_0001>

<llo_original>
// kernel: skipconn2d_pallas.3
$region0: #{skipconn2d_pallas.3}
  #allocation0 [shape = 'u32[]', space=smem, size = 0x4, offset = 0x4, fixed_abs, tag = 'smem constant byte address 0x4 - core index']
  #allocation1 [shape = 'u32[144,128]{1,0:T(1,128)}', space=vmem, size = 0x12000, scoped, tag = 'internal scratch']
  %s0 = inlined_call_operand.vmem [shape: f32[2,4,64], index: 0, kind: input, shape index: {}]
  %s1 = inlined_call_operand.vmem [shape: f32[8,4], index: 1, kind: input, shape index: {}]
  %s2 = inlined_call_operand.vmem [shape: f32[8,1], index: 2, kind: input, shape index: {}]
  %s3 = inlined_call_operand.vmem [shape: f32[8,1], index: 3, kind: input, shape index: {}]
  %s4 = inlined_call_operand.vmem [shape: f32[2,8,64], index: 4, kind: output, shape index: {}]
  %s5 = sld [smem:[#allocation0]]
  $region49: #{skipconn2d_pallas.3} parent=0
    _
  %s7 = ssub.s32 1, %s5
  %s8 = scalar_select 0, %s7, %s5
  loop: start=0, step=1, limit=4
  $region2: #{skipconn2d_pallas.3} parent=0 // loop_pre_header
    _
  $region3: #{skipconn2d_pallas.3} parent=0 // loop_header
    %s10 = sphi 0, %s14
    %p11 = scmp.ge.s32.totalorder %s10, 4
    %s17 = sphi 0, %s29
    %s18 = sphi 0, %s25
    %s19 = sphi 0, %s17
    %s20 = sphi 0, %s18
    %s21 = sphi 0, %s19
    %s22 = sphi 0, %s20
    %s34 = sphi 0, %s36
    %s37 = sphi 0, %s34
    %s38 = sphi 0, %s37
    %s54 = sphi 0, %s38
    %s58 = sphi 0, %s58
    %s60 = sphi 0, %s58
    %s61 = sphi 0, %s60
    %s75 = sphi 0, %s61
    %s79 = sphi 0, %s79
    %s81 = sphi 0, %s79
    %s82 = sphi 0, %s81
    %s96 = sphi 0, %s82
    %s100 = sphi 0, %s100
    %s102 = sphi 0, %s100
    %s103 = sphi 0, %s102
    %s117 = sphi 0, %s103
    %s125 = sphi 0, %s127
    %s128 = sphi 0, %s125
    %s129 = sphi 0, %s128
    %s145 = sphi 0, %s129
  $region4: #{skipconn2d_pallas.3} parent=0 // loop_header_branch
    %13 = sbr.rel (%p11) target = $region8
  $region5: #{skipconn2d_pallas.3} parent=0 // loop_body
    %s15 = ssub.s32 %s10, 1
    %s16 = ssub.s32 %s10, 2
    %s23 = sadd.s32 1, %s18
    %p24 = scmp.ge.s32.totalorder %s23, 1
    %s25 = scalar_select %p24, 0, %s23
    %s26 = sadd.s32 1, %s17
    %s27 = scalar_select %p24, %s26, %s17
    %p28 = scmp.ge.s32.totalorder %s27, 2
    %s29 = scalar_select %p28, 0, %s27
    %s30 = ssub.s32 %s17, %s29
    %s31 = ssub.s32 %s18, %s25
    %s32 = sor.u32 %s30, %s31
    %p33 = scmp.eq.s32.totalorder %s32, 0
    %s35 = sadd.s32 %s34, 1
    %s36 = scalar_select %p33, %s34, %s35
    %p39 = pneg %p33
    %p40 = scmp.eq.s32.totalorder %s10, 1
    %p41 = por %p39, %p40
    %p42 = scmp.ne.s32.totalorder %s34, %s37
    %p43 = scmp.eq.s32.totalorder %s10, 0
    %p44 = por %p42, %p43
    %p45 = scmp.ne.s32.totalorder %s34, %s37
    %p46 = scmp.eq.s32.totalorder %s15, 1
    %p47 = por %p45, %p46
    %p48 = scmp.ne.s32.totalorder %s37, %s38
    %p49 = scmp.eq.s32.totalorder %s15, 0
    %p50 = por %p48, %p49
    %p51 = scmp.ne.s32.totalorder %s37, %s38
    %p52 = scmp.eq.s32.totalorder %s16, 1
    %p53 = por %p51, %p52
    %p55 = scmp.ne.s32.totalorder %s38, %s54
    %p56 = scmp.eq.s32.totalorder %s16, 0
    %p57 = por %p55, %p56
    %s59 = sadd.s32 %s58, 1
    %p62 = scmp.eq.s32.totalorder %s10, 1
    %p63 = scmp.ne.s32.totalorder %s58, %s60
    %p64 = scmp.eq.s32.totalorder %s10, 0
    %p65 = por %p63, %p64
    %p66 = scmp.ne.s32.totalorder %s58, %s60
    %p67 = scmp.eq.s32.totalorder %s15, 1
    %p68 = por %p66, %p67
    %p69 = scmp.ne.s32.totalorder %s60, %s61
    %p70 = scmp.eq.s32.totalorder %s15, 0
    %p71 = por %p69, %p70
    %p72 = scmp.ne.s32.totalorder %s60, %s61
    %p73 = scmp.eq.s32.totalorder %s16, 1
    %p74 = por %p72, %p73
    %p76 = scmp.ne.s32.totalorder %s61, %s75
    %p77 = scmp.eq.s32.totalorder %s16, 0
    %p78 = por %p76, %p77
    %s80 = sadd.s32 %s79, 1
    %p83 = scmp.eq.s32.totalorder %s10, 1
    %p84 = scmp.ne.s32.totalorder %s79, %s81
    %p85 = scmp.eq.s32.totalorder %s10, 0
    %p86 = por %p84, %p85
    %p87 = scmp.ne.s32.totalorder %s79, %s81
    %p88 = scmp.eq.s32.totalorder %s15, 1
    %p89 = por %p87, %p88
    %p90 = scmp.ne.s32.totalorder %s81, %s82
    %p91 = scmp.eq.s32.totalorder %s15, 0
    %p92 = por %p90, %p91
    %p93 = scmp.ne.s32.totalorder %s81, %s82
    %p94 = scmp.eq.s32.totalorder %s16, 1
    %p95 = por %p93, %p94
    %p97 = scmp.ne.s32.totalorder %s82, %s96
    %p98 = scmp.eq.s32.totalorder %s16, 0
    %p99 = por %p97, %p98
    %s101 = sadd.s32 %s100, 1
    %p104 = scmp.eq.s32.totalorder %s10, 1
    %p105 = scmp.ne.s32.totalorder %s100, %s102
    %p106 = scmp.eq.s32.totalorder %s10, 0
    %p107 = por %p105, %p106
    %p108 = scmp.ne.s32.totalorder %s100, %s102
    %p109 = scmp.eq.s32.totalorder %s15, 1
    %p110 = por %p108, %p109
    %p111 = scmp.ne.s32.totalorder %s102, %s103
    %p112 = scmp.eq.s32.totalorder %s15, 0
    %p113 = por %p111, %p112
    %p114 = scmp.ne.s32.totalorder %s102, %s103
    %p115 = scmp.eq.s32.totalorder %s16, 1
    %p116 = por %p114, %p115
    %p118 = scmp.ne.s32.totalorder %s103, %s117
    %p119 = scmp.eq.s32.totalorder %s16, 0
    %p120 = por %p118, %p119
    %s121 = ssub.s32 %s17, %s29
    %s122 = ssub.s32 %s18, %s25
    %s123 = sor.u32 %s121, %s122
    %p124 = scmp.eq.s32.totalorder %s123, 0
    %s126 = sadd.s32 %s125, 1
    %s127 = scalar_select %p124, %s125, %s126
    %p130 = pneg %p124
    %p131 = scmp.eq.s32.totalorder %s10, 1
    %p132 = por %p130, %p131
    %p133 = scmp.ne.s32.totalorder %s125, %s128
    %p134 = scmp.eq.s32.totalorder %s10, 0
    %p135 = por %p133, %p134
    %p136 = scmp.ne.s32.totalorder %s125, %s128
    %p137 = scmp.eq.s32.totalorder %s15, 1
    %p138 = por %p136, %p137
    %p139 = scmp.ne.s32.totalorder %s128, %s129
    %p140 = scmp.eq.s32.totalorder %s15, 0
    %p141 = por %p139, %p140
    %p142 = scmp.ne.s32.totalorder %s128, %s129
    %p143 = scmp.eq.s32.totalorder %s16, 1
    %p144 = por %p142, %p143
    %p146 = scmp.ne.s32.totalorder %s129, %s145
    %p147 = scmp.eq.s32.totalorder %s16, 0
    %p148 = por %p146, %p147
    %p149 = scmp.le.s32.totalorder 1, %s10
    %p150 = scmp.lt.s32.totalorder %s10, 3
    %p151 = pnand %p149, %p150
    %p152 = pneg %p151
    // Predicated region
    $region9: #{skipconn2d_pallas.3} parent=5 // pred_check
      _
    $region10: #{skipconn2d_pallas.3} parent=5 // pred_check_branch
      %154 = sbr.rel (%p151) target = $region12
    $region11: #{skipconn2d_pallas.3} parent=5 // pred_region
      %s155 = ssub.s32 %s10, 1
      // Predicated region
      $region13: #{skipconn2d_pallas.3} parent=11 // pred_check
        %p156 = pneg %p71
      $region14: #{skipconn2d_pallas.3} parent=11 // pred_check_branch
        %158 = sbr.rel (%p156) target = $region16
      $region15: #{skipconn2d_pallas.3} parent=11 // pred_region
        _
      $region16: #{skipconn2d_pallas.3} parent=11 // pred_fallthru
        _
      // Predicated region
      $region17: #{skipconn2d_pallas.3} parent=11 // pred_check
        %p159 = pneg %p92
      $region18: #{skipconn2d_pallas.3} parent=11 // pred_check_branch
        %161 = sbr.rel (%p159) target = $region20
      $region19: #{skipconn2d_pallas.3} parent=11 // pred_region
        _
      $region20: #{skipconn2d_pallas.3} parent=11 // pred_fallthru
        _
      // Predicated region
      $region21: #{skipconn2d_pallas.3} parent=11 // pred_check
        %p162 = pneg %p113
      $region22: #{skipconn2d_pallas.3} parent=11 // pred_check_branch
        %164 = sbr.rel (%p162) target = $region24
      $region23: #{skipconn2d_pallas.3} parent=11 // pred_region
        _
      $region24: #{skipconn2d_pallas.3} parent=11 // pred_fallthru
        _
    $region12: #{skipconn2d_pallas.3} parent=5 // pred_fallthru
      _
    %p165 = scmp.lt.s32.totalorder %s10, 2
    // Predicated region
    $region25: #{skipconn2d_pallas.3} parent=5 // pred_check
      %p166 = pneg %p165
    $region26: #{skipconn2d_pallas.3} parent=5 // pred_check_branch
      %168 = sbr.rel (%p166) target = $region28
    $region27: #{skipconn2d_pallas.3} parent=5 // pred_region
      // Predicated region
      $region29: #{skipconn2d_pallas.3} parent=27 // pred_check
        %p169 = pneg %p44
      $region30: #{skipconn2d_pallas.3} parent=27 // pred_check_branch
        %171 = sbr.rel (%p169) target = $region32
      $region31: #{skipconn2d_pallas.3} parent=27 // pred_region
        %p172 = scmp.lt.s32.totalorder %s17, 1
        %s173 = scalar_select %p172, %s17, 1
        %p174 = scmp.lt.s32.totalorder %s18, 0
        %s175 = scalar_select %p174, %s18, 0
        %s176 = sadd.s32 %s175, %s173
        %s177 = smul.addr %s176, 4
        %s178 = scalar_lea.vmem %s0, %s177
      $region32: #{skipconn2d_pallas.3} parent=27 // pred_fallthru
        _
    $region28: #{skipconn2d_pallas.3} parent=5 // pred_fallthru
      _
    %p179 = scmp.le.s32.totalorder 1, %s10
    %p180 = scmp.lt.s32.totalorder %s10, 3
    %p181 = pnand %p179, %p180
    %p182 = pneg %p181
    // Predicated region
    $region33: #{skipconn2d_pallas.3} parent=5 // pred_check
      _
    $region34: #{skipconn2d_pallas.3} parent=5 // pred_check_branch
      %184 = sbr.rel (%p181) target = $region36
    $region35: #{skipconn2d_pallas.3} parent=5 // pred_region
      %s185 = ssub.s32 %s10, 1
      %p186 = scmp.lt.s32.totalorder %s19, 1
      %s187 = scalar_select %p186, %s19, 1
      %p188 = scmp.lt.s32.totalorder %s20, 0
      %s189 = scalar_select %p188, %s20, 0
      %s190 = sadd.s32 %s189, %s187
      %s191 = smul.addr %s190, 4
      %s192 = scalar_lea.vmem %s0, %s191
      %p193 = pneg %p50
      %p194 = pneg %p47
      %p195 = pneg %p71
      %p196 = pneg %p68
      %p197 = pneg %p92
      %p198 = pneg %p89
      %p199 = pneg %p113
      %p200 = pneg %p110
      %p201 = pneg %p141
      %p202 = pneg %p138
      %p203 = scmp.lt.s32.totalorder %s19, 1
      %s204 = scalar_select %p203, %s19, 1
      %p205 = scmp.lt.s32.totalorder %s20, 0
      %s206 = scalar_select %p205, %s20, 0
      %s207 = sadd.s32 %s206, %s204
      %s208 = smul.addr %s207, 8
      %s209 = scalar_lea.vmem %s4, %s208
      %p210 = scmp.lt.s32.totalorder %s19, 1
      %s211 = scalar_select %p210, %s19, 1
      %p212 = scmp.lt.s32.totalorder %s20, 0
      %s213 = scalar_select %p212, %s20, 0
      %s214 = sadd.s32 %s213, %s211
      %s215 = smul.addr %s214, 4
      %s216 = scalar_lea.vmem %s0, %s215
      %p217 = scmp.lt.s32.totalorder %s19, 1
      %s218 = scalar_select %p217, %s19, 1
      %p219 = scmp.lt.s32.totalorder %s20, 0
      %s220 = scalar_select %p219, %s20, 0
      %s221 = sadd.s32 %s220, %s218
      %s222 = smul.addr %s221, 8
      %s223 = scalar_lea.vmem %s4, %s222
      %v224 = vld [vmem:[%s216] sm:$0xf]
      %v225 = vld [vmem:[%s1] sm:$0xff]
      %vm226 = vcmask 31744
      %v228 = vsel %vm226, %v225, 0
      %vm230 = vcmask 1043456
      %v232 = vsel %vm230, %v224, 0
      %234 = vmatprep.subr.mxu0 0.0
      %235 = vmatpush1.msra.mxu0 0.0
      %236 = vmatprep.subr.mxu0 0.0
      %237 = vmatpush1.msra.mxu0 0.0
      %238 = vmatprep.subr.mxu0 0.0
      %239 = vmatpush1.msra.mxu0 0.0
      %240 = vmatprep.subr.mxu0 0.0
      %241 = vmatpush1.msra.mxu0 0.0
      %242 = vmatprep.subr.mxu0 0.0
      %243 = vmatpush1.msra.mxu0 0.0
      %244 = vmatprep.subr.mxu0 0.0
      %245 = vmatpush1.msra.mxu0 0.0
      %246 = vmatprep.subr.mxu0 0.0
      %247 = vmatpush1.msra.mxu0 0.0
      %248 = vmatprep.subr.mxu0 0.0
      %249 = vmatpush1.msra.mxu0 0.0
      %250 = vmatprep.subr.mxu0 0.0
      %251 = vmatpush1.msra.mxu0 0.0
      %252 = vmatprep.subr.mxu0 0.0
      %253 = vmatpush1.msra.mxu0 0.0
      %254 = vmatprep.subr.mxu0 0.0
      %255 = vmatpush1.msra.mxu0 0.0
      %256 = vmatprep.subr.mxu0 0.0
      %257 = vmatpush1.msra.mxu0 0.0
      %258 = vmatprep.subr.mxu0 0.0
      %259 = vmatpush1.msra.mxu0 0.0
      %260 = vmatprep.subr.mxu0 0.0
      %261 = vmatpush1.msra.mxu0 0.0
      %262 = vmatprep.subr.mxu0 0.0
      %263 = vmatpush1.msra.mxu0 0.0
      %264 = vmatprep.subr.mxu0 0.0
      %265 = vmatpush1.msra.mxu0 %v232
      %266 = vmatprep.subr.mxu0 0.0
      %267 = vmatpush2.msra.mxu0 0.0
      %268 = vmatprep.subr.mxu0 0.0
      %269 = vmatpush2.msra.mxu0 0.0
      %270 = vmatprep.subr.mxu0 0.0
      %271 = vmatpush2.msra.mxu0 0.0
      %272 = vmatprep.subr.mxu0 0.0
      %273 = vmatpush2.msra.mxu0 0.0
      %274 = vmatprep.subr.mxu0 0.0
      %275 = vmatpush2.msra.mxu0 0.0
      %276 = vmatprep.subr.mxu0 0.0
      %277 = vmatpush2.msra.mxu0 0.0
      %278 = vmatprep.subr.mxu0 0.0
      %279 = vmatpush2.msra.mxu0 0.0
      %280 = vmatprep.subr.mxu0 0.0
      %281 = vmatpush2.msra.mxu0 0.0
      %282 = vmatprep.subr.mxu0 0.0
      %283 = vmatpush2.msra.mxu0 0.0
      %284 = vmatprep.subr.mxu0 0.0
      %285 = vmatpush2.msra.mxu0 0.0
      %286 = vmatprep.subr.mxu0 0.0
      %287 = vmatpush2.msra.mxu0 0.0
      %288 = vmatprep.subr.mxu0 0.0
      %289 = vmatpush2.msra.mxu0 0.0
      %290 = vmatprep.subr.mxu0 0.0
      %291 = vmatpush2.msra.mxu0 0.0
      %292 = vmatprep.subr.mxu0 0.0
      %293 = vmatpush2.msra.mxu0 0.0
      %294 = vmatprep.subr.mxu0 0.0
      %295 = vmatpush2.msra.mxu0 0.0
      %296 = vmatprep.subr.mxu0 0.0
      %297 = vmatpush2.msra.mxu0 0.0
      %298 = vmatprep.mubr.f32.mxu0 0.0
      %299 = vmatmul.mubr.f32.gmra.mxu0 %v228
      %v300 = vpop.f32.mrf.mxu0
      %v301 = vadd.f32 0.0, %v300
      %v302 = vpop.f32.mrf.mxu0
      %303 = vdwg.mxu0
      %v304 = vld [vmem:[%s2] sm:$0xff]
      %306 = vset.pattern.permute.xlu0 0
      %307 = vperm.xlu0 %306, %v304
      %v308 = vpop.permute.xlu0 %307
      %v310 = vmul.f32 %v301, %v308
      %v311 = vld [vmem:[%s3] sm:$0xff]
      %313 = vset.pattern.permute.xlu0 0
      %314 = vperm.xlu0 %313, %v311
      %v315 = vpop.permute.xlu0 %314
      %v317 = vadd.f32 %v310, %v315
      %vm318 = vcmask 523264
      %319 = vst.msk [vmem:[%s223] sm:$0xff] %vm318, %v317
      %p320 = scmp.lt.s32.totalorder %s19, 1
      %s321 = scalar_select %p320, %s19, 1
      %p322 = scmp.lt.s32.totalorder %s20, 0
      %s323 = scalar_select %p322, %s20, 0
      %s324 = sadd.s32 %s323, %s321
      %s325 = smul.addr %s324, 8
      %s326 = scalar_lea.vmem %s4, %s325
      // Predicated region
      $region37: #{skipconn2d_pallas.3} parent=35 // pred_check
        %p327 = pneg %p138
      $region38: #{skipconn2d_pallas.3} parent=35 // pred_check_branch
        %329 = sbr.rel (%p327) target = $region40
      $region39: #{skipconn2d_pallas.3} parent=35 // pred_region
        _
      $region40: #{skipconn2d_pallas.3} parent=35 // pred_fallthru
        _
    $region36: #{skipconn2d_pallas.3} parent=5 // pred_fallthru
      _
    %p330 = scmp.le.s32.totalorder 2, %s10
    // Predicated region
    $region41: #{skipconn2d_pallas.3} parent=5 // pred_check
      %p331 = pneg %p330
    $region42: #{skipconn2d_pallas.3} parent=5 // pred_check_branch
      %333 = sbr.rel (%p331) target = $region44
    $region43: #{skipconn2d_pallas.3} parent=5 // pred_region
      %s334 = ssub.s32 %s10, 2
      // Predicated region
      $region45: #{skipconn2d_pallas.3} parent=43 // pred_check
        %p335 = pneg %p144
      $region46: #{skipconn2d_pallas.3} parent=43 // pred_check_branch
        %337 = sbr.rel (%p335) target = $region48
      $region47: #{skipconn2d_pallas.3} parent=43 // pred_region
        %p338 = scmp.lt.s32.totalorder %s21, 1
        %s339 = scalar_select %p338, %s21, 1
        %p340 = scmp.lt.s32.totalorder %s22, 0
        %s341 = scalar_select %p340, %s22, 0
        %s342 = sadd.s32 %s341, %s339
        %s343 = smul.addr %s342, 8
        %s344 = scalar_lea.vmem %s4, %s343
      $region48: #{skipconn2d_pallas.3} parent=43 // pred_fallthru
        _
    $region44: #{skipconn2d_pallas.3} parent=5 // pred_fallthru
      _
  $region6: #{skipconn2d_pallas.3} parent=0 // loop_footer
    %s14 = sadd.s32 1, %s10
  $region7: #{skipconn2d_pallas.3} parent=0 // loop_footer_branch
    %9 = sbr.rel target = $region3
  $region8: #{skipconn2d_pallas.3} parent=0 // loop_exit
    _

// kernel: skipconn2d_pallas.2
$region0: #{skipconn2d_pallas.2}
  #allocation0 [shape = 'u32[]', space=smem, size = 0x4, offset = 0x4, fixed_abs, tag = 'smem constant byte address 0x4 - core index']
  #allocation1 [shape = 'u32[144,128]{1,0:T(1,128)}', space=vmem, size = 0x12000, scoped, tag = 'internal scratch']
  %s0 = inlined_call_operand.vmem [shape: f32[2,4,64], index: 0, kind: input, shape index: {}]
  %s1 = inlined_call_operand.vmem [shape: f32[2,4,4], index: 1, kind: output, shape index: {0}]
  %s2 = inlined_call_operand.vmem [shape: f32[2,4,1], index: 2, kind: output, shape index: {1}]
  %3 = xla_tuple %s1, %s2
  %s4 = sld [smem:[#allocation0]]
  $region49: #{skipconn2d_pallas.2} parent=0
    _
  %s6 = ssub.s32 1, %s4
  %s7 = scalar_select 0, %s6, %s4
  loop: start=0, step=1, limit=4
  $region2: #{skipconn2d_pallas.2} parent=0 // loop_pre_header
    _
  $region3: #{skipconn2d_pallas.2} parent=0 // loop_header
    %s9 = sphi 0, %s13
    %p10 = scmp.ge.s32.totalorder %s9, 4
    %s16 = sphi 0, %s28
    %s17 = sphi 0, %s24
    %s18 = sphi 0, %s16
    %s19 = sphi 0, %s17
    %s20 = sphi 0, %s18
    %s21 = sphi 0, %s19
    %s33 = sphi 0, %s35
    %s36 = sphi 0, %s33
    %s37 = sphi 0, %s36
    %s53 = sphi 0, %s37
    %s59 = sphi 0, %s61
    %s62 = sphi 0, %s59
    %s63 = sphi 0, %s62
    %s79 = sphi 0, %s63
    %s85 = sphi 0, %s87
    %s88 = sphi 0, %s85
    %s89 = sphi 0, %s88
    %s105 = sphi 0, %s89
  $region4: #{skipconn2d_pallas.2} parent=0 // loop_header_branch
    %12 = sbr.rel (%p10) target = $region8
  $region5: #{skipconn2d_pallas.2} parent=0 // loop_body
    %s14 = ssub.s32 %s9, 1
    %s15 = ssub.s32 %s9, 2
    %s22 = sadd.s32 1, %s17
    %p23 = scmp.ge.s32.totalorder %s22, 1
    %s24 = scalar_select %p23, 0, %s22
    %s25 = sadd.s32 1, %s16
    %s26 = scalar_select %p23, %s25, %s16
    %p27 = scmp.ge.s32.totalorder %s26, 2
    %s28 = scalar_select %p27, 0, %s26
    %s29 = ssub.s32 %s16, %s28
    %s30 = ssub.s32 %s17, %s24
    %s31 = sor.u32 %s29, %s30
    %p32 = scmp.eq.s32.totalorder %s31, 0
    %s34 = sadd.s32 %s33, 1
    %s35 = scalar_select %p32, %s33, %s34
    %p38 = pneg %p32
    %p39 = scmp.eq.s32.totalorder %s9, 1
    %p40 = por %p38, %p39
    %p41 = scmp.ne.s32.totalorder %s33, %s36
    %p42 = scmp.eq.s32.totalorder %s9, 0
    %p43 = por %p41, %p42
    %p44 = scmp.ne.s32.totalorder %s33, %s36
    %p45 = scmp.eq.s32.totalorder %s14, 1
    %p46 = por %p44, %p45
    %p47 = scmp.ne.s32.totalorder %s36, %s37
    %p48 = scmp.eq.s32.totalorder %s14, 0
    %p49 = por %p47, %p48
    %p50 = scmp.ne.s32.totalorder %s36, %s37
    %p51 = scmp.eq.s32.totalorder %s15, 1
    %p52 = por %p50, %p51
    %p54 = scmp.ne.s32.totalorder %s37, %s53
    %p55 = scmp.eq.s32.totalorder %s15, 0
    %p56 = por %p54, %p55
    %s57 = ssub.s32 %s16, %s28
    %p58 = scmp.eq.s32.totalorder %s57, 0
    %s60 = sadd.s32 %s59, 1
    %s61 = scalar_select %p58, %s59, %s60
    %p64 = pneg %p58
    %p65 = scmp.eq.s32.totalorder %s9, 1
    %p66 = por %p64, %p65
    %p67 = scmp.ne.s32.totalorder %s59, %s62
    %p68 = scmp.eq.s32.totalorder %s9, 0
    %p69 = por %p67, %p68
    %p70 = scmp.ne.s32.totalorder %s59, %s62
    %p71 = scmp.eq.s32.totalorder %s14, 1
    %p72 = por %p70, %p71
    %p73 = scmp.ne.s32.totalorder %s62, %s63
    %p74 = scmp.eq.s32.totalorder %s14, 0
    %p75 = por %p73, %p74
    %p76 = scmp.ne.s32.totalorder %s62, %s63
    %p77 = scmp.eq.s32.totalorder %s15, 1
    %p78 = por %p76, %p77
    %p80 = scmp.ne.s32.totalorder %s63, %s79
    %p81 = scmp.eq.s32.totalorder %s15, 0
    %p82 = por %p80, %p81
    %s83 = ssub.s32 %s16, %s28
    %p84 = scmp.eq.s32.totalorder %s83, 0
    %s86 = sadd.s32 %s85, 1
    %s87 = scalar_select %p84, %s85, %s86
    %p90 = pneg %p84
    %p91 = scmp.eq.s32.totalorder %s9, 1
    %p92 = por %p90, %p91
    %p93 = scmp.ne.s32.totalorder %s85, %s88
    %p94 = scmp.eq.s32.totalorder %s9, 0
    %p95 = por %p93, %p94
    %p96 = scmp.ne.s32.totalorder %s85, %s88
    %p97 = scmp.eq.s32.totalorder %s14, 1
    %p98 = por %p96, %p97
    %p99 = scmp.ne.s32.totalorder %s88, %s89
    %p100 = scmp.eq.s32.totalorder %s14, 0
    %p101 = por %p99, %p100
    %p102 = scmp.ne.s32.totalorder %s88, %s89
    %p103 = scmp.eq.s32.totalorder %s15, 1
    %p104 = por %p102, %p103
    %p106 = scmp.ne.s32.totalorder %s89, %s105
    %p107 = scmp.eq.s32.totalorder %s15, 0
    %p108 = por %p106, %p107
    %p109 = scmp.le.s32.totalorder 1, %s9
    %p110 = scmp.lt.s32.totalorder %s9, 3
    %p111 = pnand %p109, %p110
    %p112 = pneg %p111
    // Predicated region
    $region9: #{skipconn2d_pallas.2} parent=5 // pred_check
      _
    $region10: #{skipconn2d_pallas.2} parent=5 // pred_check_branch
      %114 = sbr.rel (%p111) target = $region12
    $region11: #{skipconn2d_pallas.2} parent=5 // pred_region
      %s115 = ssub.s32 %s9, 1
    $region12: #{skipconn2d_pallas.2} parent=5 // pred_fallthru
      _
    %p116 = scmp.lt.s32.totalorder %s9, 2
    // Predicated region
    $region13: #{skipconn2d_pallas.2} parent=5 // pred_check
      %p117 = pneg %p116
    $region14: #{skipconn2d_pallas.2} parent=5 // pred_check_branch
      %119 = sbr.rel (%p117) target = $region16
    $region15: #{skipconn2d_pallas.2} parent=5 // pred_region
      // Predicated region
      $region17: #{skipconn2d_pallas.2} parent=15 // pred_check
        %p120 = pneg %p43
      $region18: #{skipconn2d_pallas.2} parent=15 // pred_check_branch
        %122 = sbr.rel (%p120) target = $region20
      $region19: #{skipconn2d_pallas.2} parent=15 // pred_region
        %p123 = scmp.lt.s32.totalorder %s16, 1
        %s124 = scalar_select %p123, %s16, 1
        %p125 = scmp.lt.s32.totalorder %s17, 0
        %s126 = scalar_select %p125, %s17, 0
        %s127 = sadd.s32 %s126, %s124
        %s128 = smul.addr %s127, 4
        %s129 = scalar_lea.vmem %s0, %s128
      $region20: #{skipconn2d_pallas.2} parent=15 // pred_fallthru
        _
    $region16: #{skipconn2d_pallas.2} parent=5 // pred_fallthru
      _
    %p130 = scmp.le.s32.totalorder 1, %s9
    %p131 = scmp.lt.s32.totalorder %s9, 3
    %p132 = pnand %p130, %p131
    %p133 = pneg %p132
    // Predicated region
    $region21: #{skipconn2d_pallas.2} parent=5 // pred_check
      _
    $region22: #{skipconn2d_pallas.2} parent=5 // pred_check_branch
      %135 = sbr.rel (%p132) target = $region24
    $region23: #{skipconn2d_pallas.2} parent=5 // pred_region
      %s136 = ssub.s32 %s9, 1
      %p137 = scmp.lt.s32.totalorder %s18, 1
      %s138 = scalar_select %p137, %s18, 1
      %p139 = scmp.lt.s32.totalorder %s19, 0
      %s140 = scalar_select %p139, %s19, 0
      %s141 = sadd.s32 %s140, %s138
      %s142 = smul.addr %s141, 4
      %s143 = scalar_lea.vmem %s0, %s142
      %p144 = pneg %p49
      %p145 = pneg %p46
      %p146 = pneg %p75
      %p147 = pneg %p72
      %p148 = scmp.lt.s32.totalorder %s18, 1
      %s149 = scalar_select %p148, %s18, 1
      %s150 = smul.addr %s149, 4
      %s151 = scalar_lea.vmem %s1, %s150
      %p152 = pneg %p101
      %p153 = pneg %p98
      %p154 = scmp.lt.s32.totalorder %s18, 1
      %s155 = scalar_select %p154, %s18, 1
      %s156 = smul.addr %s155, 4
      %s157 = scalar_lea.vmem %s2, %s156
      %p158 = scmp.lt.s32.totalorder %s18, 1
      %s159 = scalar_select %p158, %s18, 1
      %p160 = scmp.lt.s32.totalorder %s19, 0
      %s161 = scalar_select %p160, %s19, 0
      %s162 = sadd.s32 %s161, %s159
      %s163 = smul.addr %s162, 4
      %s164 = scalar_lea.vmem %s0, %s163
      %p165 = scmp.lt.s32.totalorder %s18, 1
      %s166 = scalar_select %p165, %s18, 1
      %s167 = smul.addr %s166, 4
      %s168 = scalar_lea.vmem %s1, %s167
      %p169 = scmp.lt.s32.totalorder %s18, 1
      %s170 = scalar_select %p169, %s18, 1
      %s171 = smul.addr %s170, 4
      %s172 = scalar_lea.vmem %s2, %s171
      %p173 = scmp.eq.s32.totalorder %s19, 0
      // Predicated region
      $region25: #{skipconn2d_pallas.2} parent=23 // pred_check
        %p174 = pneg %p173
      $region26: #{skipconn2d_pallas.2} parent=23 // pred_check_branch
        %176 = sbr.rel (%p174) target = $region28
      $region27: #{skipconn2d_pallas.2} parent=23 // pred_region
        %vm177 = vcmask 27648
        %178 = vst.msk [vmem:[%s168] sm:$0xf] %vm177, 0.0
        %vm179 = vcmask 3072
        %180 = vst.msk [vmem:[%s172] sm:$0xf] %vm179, 0.0
      $region28: #{skipconn2d_pallas.2} parent=23 // pred_fallthru
        _
      %v181 = vld [vmem:[%s164] sm:$0xf]
      %vm182 = vcmask 523264
      %v184 = vsel %vm182, %v181, 0
      %186 = vmatprep.subr.mxu0 0.0
      %187 = vmatpush1.xpose.msra.mxu0 0.0
      %188 = vmatprep.subr.mxu0 0.0
      %189 = vmatpush1.xpose.msra.mxu0 0.0
      %190 = vmatprep.subr.mxu0 0.0
      %191 = vmatpush1.xpose.msra.mxu0 0.0
      %192 = vmatprep.subr.mxu0 0.0
      %193 = vmatpush1.xpose.msra.mxu0 0.0
      %194 = vmatprep.subr.mxu0 0.0
      %195 = vmatpush1.xpose.msra.mxu0 0.0
      %196 = vmatprep.subr.mxu0 0.0
      %197 = vmatpush1.xpose.msra.mxu0 0.0
      %198 = vmatprep.subr.mxu0 0.0
      %199 = vmatpush1.xpose.msra.mxu0 0.0
      %200 = vmatprep.subr.mxu0 0.0
      %201 = vmatpush1.xpose.msra.mxu0 0.0
      %202 = vmatprep.subr.mxu0 0.0
      %203 = vmatpush1.xpose.msra.mxu0 0.0
      %204 = vmatprep.subr.mxu0 0.0
      %205 = vmatpush1.xpose.msra.mxu0 0.0
      %206 = vmatprep.subr.mxu0 0.0
      %207 = vmatpush1.xpose.msra.mxu0 0.0
      %208 = vmatprep.subr.mxu0 0.0
      %209 = vmatpush1.xpose.msra.mxu0 0.0
      %210 = vmatprep.subr.mxu0 0.0
      %211 = vmatpush1.xpose.msra.mxu0 0.0
      %212 = vmatprep.subr.mxu0 0.0
      %213 = vmatpush1.xpose.msra.mxu0 0.0
      %214 = vmatprep.subr.mxu0 0.0
      %215 = vmatpush1.xpose.msra.mxu0 0.0
      %216 = vmatprep.subr.mxu0 0.0
      %217 = vmatpush1.xpose.msra.mxu0 %v184
      %218 = vmatprep.subr.mxu0 0.0
      %219 = vmatpush2.xpose.msra.mxu0 0.0
      %220 = vmatprep.subr.mxu0 0.0
      %221 = vmatpush2.xpose.msra.mxu0 0.0
      %222 = vmatprep.subr.mxu0 0.0
      %223 = vmatpush2.xpose.msra.mxu0 0.0
      %224 = vmatprep.subr.mxu0 0.0
      %225 = vmatpush2.xpose.msra.mxu0 0.0
      %226 = vmatprep.subr.mxu0 0.0
      %227 = vmatpush2.xpose.msra.mxu0 0.0
      %228 = vmatprep.subr.mxu0 0.0
      %229 = vmatpush2.xpose.msra.mxu0 0.0
      %230 = vmatprep.subr.mxu0 0.0
      %231 = vmatpush2.xpose.msra.mxu0 0.0
      %232 = vmatprep.subr.mxu0 0.0
      %233 = vmatpush2.xpose.msra.mxu0 0.0
      %234 = vmatprep.subr.mxu0 0.0
      %235 = vmatpush2.xpose.msra.mxu0 0.0
      %236 = vmatprep.subr.mxu0 0.0
      %237 = vmatpush2.xpose.msra.mxu0 0.0
      %238 = vmatprep.subr.mxu0 0.0
      %239 = vmatpush2.xpose.msra.mxu0 0.0
      %240 = vmatprep.subr.mxu0 0.0
      %241 = vmatpush2.xpose.msra.mxu0 0.0
      %242 = vmatprep.subr.mxu0 0.0
      %243 = vmatpush2.xpose.msra.mxu0 0.0
      %244 = vmatprep.subr.mxu0 0.0
      %245 = vmatpush2.xpose.msra.mxu0 0.0
      %246 = vmatprep.subr.mxu0 0.0
      %247 = vmatpush2.xpose.msra.mxu0 0.0
      %248 = vmatprep.subr.mxu0 0.0
      %249 = vmatpush2.xpose.msra.mxu0 0.0
      %250 = vmatprep.mubr.f32.mxu0 0.0
      %251 = vmatmul.mubr.f32.gmra.mxu0 %v184
      %v252 = vpop.f32.mrf.mxu0
      %v253 = vadd.f32 0.0, %v252
      %v254 = vpop.f32.mrf.mxu0
      %255 = vdwg.mxu0
      %vm256 = vcmask 519168
      %v257 = vsel %vm256, %v181, 0.0
      %258 = vadd.xlane.f32.xlu0 %v257
      %v259 = vpop.xlane.xlu0 %258
      %v260 = vld [vmem:[%s168] sm:$0xf]
      %v261 = vadd.f32 %v260, %v253
      %vm262 = vcmask 27648
      %263 = vst.msk [vmem:[%s168] sm:$0xf] %vm262, %v261
      %v264 = vld [vmem:[%s172] sm:$0xf]
      %v265 = vadd.f32 %v264, %v259
      %vm266 = vcmask 3072
      %267 = vst.msk [vmem:[%s172] sm:$0xf] %vm266, %v265
      %p268 = scmp.lt.s32.totalorder %s18, 1
      %s269 = scalar_select %p268, %s18, 1
      %s270 = smul.addr %s269, 4
      %s271 = scalar_lea.vmem %s1, %s270
      %p272 = scmp.lt.s32.totalorder %s18, 1
      %s273 = scalar_select %p272, %s18, 1
      %s274 = smul.addr %s273, 4
      %s275 = scalar_lea.vmem %s2, %s274
      // Predicated region
      $region29: #{skipconn2d_pallas.2} parent=23 // pred_check
        %p276 = pneg %p72
      $region30: #{skipconn2d_pallas.2} parent=23 // pred_check_branch
        %278 = sbr.rel (%p276) target = $region32
      $region31: #{skipconn2d_pallas.2} parent=23 // pred_region
        _
      $region32: #{skipconn2d_pallas.2} parent=23 // pred_fallthru
        _
      // Predicated region
      $region33: #{skipconn2d_pallas.2} parent=23 // pred_check
        %p279 = pneg %p98
      $region34: #{skipconn2d_pallas.2} parent=23 // pred_check_branch
        %281 = sbr.rel (%p279) target = $region36
      $region35: #{skipconn2d_pallas.2} parent=23 // pred_region
        _
      $region36: #{skipconn2d_pallas.2} parent=23 // pred_fallthru
        _
    $region24: #{skipconn2d_pallas.2} parent=5 // pred_fallthru
      _
    %p282 = scmp.le.s32.totalorder 2, %s9
    // Predicated region
    $region37: #{skipconn2d_pallas.2} parent=5 // pred_check
      %p283 = pneg %p282
    $region38: #{skipconn2d_pallas.2} parent=5 // pred_check_branch
      %285 = sbr.rel (%p283) target = $region40
    $region39: #{skipconn2d_pallas.2} parent=5 // pred_region
      %s286 = ssub.s32 %s9, 2
      // Predicated region
      $region41: #{skipconn2d_pallas.2} parent=39 // pred_check
        %p287 = pneg %p78
      $region42: #{skipconn2d_pallas.2} parent=39 // pred_check_branch
        %289 = sbr.rel (%p287) target = $region44
      $region43: #{skipconn2d_pallas.2} parent=39 // pred_region
        %p290 = scmp.lt.s32.totalorder %s20, 1
        %s291 = scalar_select %p290, %s20, 1
        %s292 = smul.addr %s291, 4
        %s293 = scalar_lea.vmem %s1, %s292
      $region44: #{skipconn2d_pallas.2} parent=39 // pred_fallthru
        _
      // Predicated region
      $region45: #{skipconn2d_pallas.2} parent=39 // pred_check
        %p294 = pneg %p104
      $region46: #{skipconn2d_pallas.2} parent=39 // pred_check_branch
        %296 = sbr.rel (%p294) target = $region48
      $region47: #{skipconn2d_pallas.2} parent=39 // pred_region
        %p297 = scmp.lt.s32.totalorder %s20, 1
        %s298 = scalar_select %p297, %s20, 1
        %s299 = smul.addr %s298, 4
        %s300 = scalar_lea.vmem %s2, %s299
      $region48: #{skipconn2d_pallas.2} parent=39 // pred_fallthru
        _
    $region40: #{skipconn2d_pallas.2} parent=5 // pred_fallthru
      _
  $region6: #{skipconn2d_pallas.2} parent=0 // loop_footer
    %s13 = sadd.s32 1, %s9
  $region7: #{skipconn2d_pallas.2} parent=0 // loop_footer_branch
    %8 = sbr.rel target = $region3
  $region8: #{skipconn2d_pallas.2} parent=0 // loop_exit
    _

</llo_original>
